<compile_context>
chip_gen: v5e
topology: v5e:2x2
jax: 0.10.0
libtpu: 0.0.40
codegen_flags: <defaults>
</compile_context>

<pallas_src>
import jax
import jax.numpy as jnp
from jax import lax
from jax.experimental import pallas as pl
from jax.experimental.pallas import tpu as pltpu


def _round_up(v, m):
    return (v + m - 1) // m * m


def _dice_loss_kernel(x_ref, tgt_ref, score_ref, num_acc, den_acc):
    # x_ref    : (C, TR, 128)  activation tile (any float dtype; widened here)
    # tgt_ref  : (1, TR, 128)  class-index tile (any int dtype; widened here)
    # score_ref: (1, C)        per-sample per-class dice score (written last step)
    # num_acc  : (C, 128) f32  VMEM scratch, per-lane partial sum of x * onehot
    # den_acc  : (C, 128) f32  VMEM scratch, per-lane partial sum of x^2 + onehot^2
    j = pl.program_id(1)

    @pl.when(j == 0)
    def _():
        num_acc[...] = jnp.zeros_like(num_acc)
        den_acc[...] = jnp.zeros_like(den_acc)

    x = x_ref[...].astype(jnp.float32)            # (C, TR, 128)
    t = tgt_ref[...].astype(jnp.int32)            # (1, TR, 128)

    # Tiny per-class iota; the == broadcasts it across (TR, 128).
    class_ids = lax.broadcasted_iota(jnp.int32, (x_ref.shape[0], 1, 1), 0)
    mask = t == class_ids                         # (C, TR, 128) one-hot mask

    # Reduce only across the sublane (TR) axis; keep lanes for the accumulator.
    num_acc[...] += jnp.sum(jnp.where(mask, x, 0.0), axis=1)            # (C, 128)
    den_acc[...] += jnp.sum(x * x + jnp.where(mask, 1.0, 0.0), axis=1)  # (C, 128)

    @pl.when(j == pl.num_programs(1) - 1)
    def _():
        num = jnp.sum(num_acc[...], axis=-1)      # (C,)  cross-lane reduce, once
        den = jnp.sum(den_acc[...], axis=-1)      # (C,)
        score = (2.0 * num) / (den + 1e-10)
        score_ref[...] = score.reshape(score_ref.shape)


def dice_loss(output, target, *, tr_cap=4096, vmem_budget_bytes=None):
    """Pallas DiceLoss.

    Args:
        output: (N, C, *spatial) float model output (f32 or bf16; bf16 is
            recommended to halve the dominant HBM read stream).
        target: (N, 1, *spatial) integer class indices in [0, C) (int8/int32).
    Returns:
        scalar float32 loss = 1 - mean_{n,c} dice_score(n, c).
    """
    n, c = output.shape[0], output.shape[1]
    s = 1
    for d in output.shape[2:]:
        s *= d

    x = output.reshape(n, c, s)
    if (not jnp.issubdtype(x.dtype, jnp.floating)) or x.dtype.itemsize > 4:
        x = x.astype(jnp.float32)

    t = target.reshape(n, 1, s)
    if (not jnp.issubdtype(t.dtype, jnp.integer)) or t.dtype.itemsize > 4:
        t = t.astype(jnp.int32)
    # Spatial padding uses the out-of-range class id `c`; widen narrow int
    # dtypes that cannot represent it.
    if jnp.iinfo(t.dtype).max < c:
        t = t.astype(jnp.int32)

    x_bytes = x.dtype.itemsize
    t_bytes = t.dtype.itemsize

    # Per-generation VMEM budget for the double-buffered input blocks.
    if vmem_budget_bytes is None:
        try:
            cap = getattr(pltpu.get_tpu_info(), "vmem_capacity_bytes", None)
        except Exception:
            cap = None
        if not cap:
            cap = 64 * 1024 * 1024  # conservative (v7x-sized) fallback
        # ~1/4 of physical VMEM, never more than 32 MiB:
        #   v5e/v6e (128 MiB) -> 32 MiB budget;  v7x (64 MiB) -> 16 MiB budget.
        vmem_budget_bytes = min(cap // 4, 32 * 1024 * 1024)

    # Spatial elements are packed as R rows of 128 lanes.  One block row costs
    # 128 * (C * x_bytes + t_bytes) bytes per buffer (both blocks are dense).
    r = _round_up(s, 128) // 128
    bytes_per_row = 128 * (c * x_bytes + t_bytes)
    tr = vmem_budget_bytes // (2 * bytes_per_row)
    tr = max(32, tr // 32 * 32)                    # multiple of 32 sublane rows
    tr = min(tr, tr_cap, _round_up(r, 32))
    r_pad = _round_up(r, tr)
    s_pad = r_pad * 128

    if s_pad != s:
        # Zero-pad activations (contribute nothing to x^2 / intersection); pad
        # targets with an out-of-range class id so the one-hot mask is false.
        x = jnp.pad(x, ((0, 0), (0, 0), (0, s_pad - s)))
        t = jnp.pad(t, ((0, 0), (0, 0), (0, s_pad - s)), constant_values=c)

    x = x.reshape(n, c, r_pad, 128)
    t = t.reshape(n, 1, r_pad, 128)

    grid = (n, r_pad // tr)

    x_blk_bytes = c * tr * 128 * x_bytes
    t_blk_bytes = tr * 128 * t_bytes
    # Double-buffered inputs + scratch/output/compiler slack; never below the
    # smallest scoped default so small problems don't get over-constrained.
    vmem_limit = max(2 * (x_blk_bytes + t_blk_bytes) + (4 << 20), 16 << 20)

    scores = pl.pallas_call(
        _dice_loss_kernel,
        out_shape=jax.ShapeDtypeStruct((n, 1, c), jnp.float32),
        grid_spec=pltpu.PrefetchScalarGridSpec(
            num_scalar_prefetch=0,
            grid=grid,
            in_specs=[
                # Leading batch dim squeezed out of the kernel Refs.
                pl.BlockSpec((None, c, tr, 128), lambda i, j: (i, 0, j, 0)),
                pl.BlockSpec((None, 1, tr, 128), lambda i, j: (i, 0, j, 0)),
            ],
            out_specs=pl.BlockSpec((None, 1, c), lambda i, j: (i, 0, 0)),
            scratch_shapes=[
                pltpu.VMEM((c, 128), jnp.float32),  # intersection partials
                pltpu.VMEM((c, 128), jnp.float32),  # union partials
            ],
        ),
        compiler_params=pltpu.CompilerParams(
            # Batch axis is independent (shards across TensorCores on v7x);
            # spatial axis is a reduction carried in VMEM scratch and must
            # stay innermost/sequential.
            dimension_semantics=("parallel", "arbitrary"),
            vmem_limit_bytes=int(vmem_limit),
        ),
    )(x, t)

    return 1.0 - jnp.mean(scores[:, 0, :])


def _dice_loss_ref(output, target):
    # Pure-JAX reference mirroring the PyTorch module exactly.
    c = output.shape[1]
    onehot = jax.nn.one_hot(target[:, 0], c, axis=1, dtype=jnp.float32)
    out = output.astype(jnp.float32)
    reduced = tuple(range(2, output.ndim))
    inter = 2.0 * jnp.sum(out * onehot, axis=reduced)
    union = jnp.sum(out ** 2, axis=reduced) + jnp.sum(onehot ** 2, axis=reduced)
    score = inter / (union + 1e-10)
    return 1.0 - jnp.mean(score)


if __name__ == "__main__":
    key = jax.random.PRNGKey(0)
    k1, k2, k3, k4 = jax.random.split(key, 4)

    # Primary check: small shape from the module spec (N=2, C=4, 16x16).
    N, C, H, W = 2, 4, 16, 16
    output = jax.random.uniform(k1, (N, C, H, W), dtype=jnp.float32)
    target = jax.random.randint(k2, (N, 1, H, W), 0, C, dtype=jnp.int32)
    loss = jax.block_until_ready(dice_loss(output, target))
    ref = jax.block_until_ready(_dice_loss_ref(output, target))
    assert jnp.isfinite(loss), "loss is not finite"
    assert jnp.allclose(loss, ref, atol=1e-5, rtol=1e-4), (loss, ref)

    # Secondary check: forces multiple spatial tiles (tiny VMEM budget) so the
    # cross-tile accumulation + padding path is exercised.
    N2, C2, H2, W2 = 2, 3, 96, 96
    out2 = jax.random.normal(k3, (N2, C2, H2, W2), dtype=jnp.float32)
    tgt2 = jax.random.randint(k4, (N2, 1, H2, W2), 0, C2, dtype=jnp.int32)
    loss2 = jax.block_until_ready(dice_loss(out2, tgt2, vmem_budget_bytes=256 * 1024))
    ref2 = jax.block_until_ready(_dice_loss_ref(out2, tgt2))
    assert jnp.isfinite(loss2), "loss2 is not finite"
    assert jnp.allclose(loss2, ref2, atol=1e-5, rtol=1e-4), (loss2, ref2)

    print("KERNEL_OK")
</pallas_src>

<mosaic_0001>
module attributes {stable_mosaic.version = 11 : i64} {
  func.func @_dice_loss_kernel(%arg0: i32, %arg1: i32, %arg2: memref<1x4x32x128xf32, #tpu.memory_space<vmem>>, %arg3: memref<1x1x32x128xi32, #tpu.memory_space<vmem>>, %arg4: memref<1x1x4xf32, #tpu.memory_space<vmem>>, %arg5: memref<4x128xf32, #tpu.memory_space<vmem>>, %arg6: memref<4x128xf32, #tpu.memory_space<vmem>>) attributes {dimension_semantics = [#tpu.dimension_semantics<parallel>, #tpu.dimension_semantics<arbitrary>], iteration_bounds = array<i64: 2, 1>, scalar_prefetch = 0 : i64, scratch_operands = 2 : i64, tpu.core_type = #tpu.core_type<tc>, window_params = [{transform_indices = @transform_0, window_bounds = array<i64: 1, 4, 32, 128>}, {transform_indices = @transform_1, window_bounds = array<i64: 1, 1, 32, 128>}, {transform_indices = @transform_2, window_bounds = array<i64: 1, 1, 4>}]} {
    %c0_i32 = arith.constant 0 : i32
    %0 = arith.cmpi eq, %arg1, %c0_i32 : i32
    %1 = arith.extui %0 : i1 to i32
    %c0_i32_0 = arith.constant 0 : i32
    %2 = arith.cmpi ne, %1, %c0_i32_0 : i32
    scf.if %2 {
      %cst_22 = arith.constant 0.000000e+00 : f32
      %29 = vector.broadcast %cst_22 : f32 to vector<4x128xf32>
      %c0_23 = arith.constant 0 : index
      %c0_24 = arith.constant 0 : index
      %30 = vector.load %arg5[%c0_23, %c0_24] : memref<4x128xf32, #tpu.memory_space<vmem>>, vector<4x128xf32>
      tpu.vector_store %arg5[%c0_23, %c0_24], %29 {strides = array<i32>} : memref<4x128xf32, #tpu.memory_space<vmem>>, vector<4x128xf32>,
      %cst_25 = arith.constant 0.000000e+00 : f32
      %31 = vector.broadcast %cst_25 : f32 to vector<4x128xf32>
      %c0_26 = arith.constant 0 : index
      %c0_27 = arith.constant 0 : index
      %32 = vector.load %arg6[%c0_26, %c0_27] : memref<4x128xf32, #tpu.memory_space<vmem>>, vector<4x128xf32>
      tpu.vector_store %arg6[%c0_26, %c0_27], %31 {strides = array<i32>} : memref<4x128xf32, #tpu.memory_space<vmem>>, vector<4x128xf32>,
    } else {
    }
    %c0 = arith.constant 0 : index
    %c0_1 = arith.constant 0 : index
    %c0_2 = arith.constant 0 : index
    %c0_3 = arith.constant 0 : index
    %3 = vector.load %arg2[%c0, %c0_1, %c0_2, %c0_3] : memref<1x4x32x128xf32, #tpu.memory_space<vmem>>, vector<1x4x32x128xf32>
    %4 = vector.shape_cast %3 : vector<1x4x32x128xf32> to vector<4x32x128xf32>
    %c0_4 = arith.constant 0 : index
    %c0_5 = arith.constant 0 : index
    %c0_6 = arith.constant 0 : index
    %c0_7 = arith.constant 0 : index
    %5 = vector.load %arg3[%c0_4, %c0_5, %c0_6, %c0_7] : memref<1x1x32x128xi32, #tpu.memory_space<vmem>>, vector<1x1x32x128xi32>
    %6 = vector.shape_cast %5 : vector<1x1x32x128xi32> to vector<1x32x128xi32>
    %7 = tpu.iota {dimensions = array<i32: 0>} : vector<4x1x1xi32>
    %8 = vector.broadcast %6 : vector<1x32x128xi32> to vector<4x32x128xi32>
    %9 = vector.broadcast %7 : vector<4x1x1xi32> to vector<4x32x128xi32>
    %10 = arith.cmpi eq, %8, %9 : vector<4x32x128xi32>
    %c0_8 = arith.constant 0 : index
    %c0_9 = arith.constant 0 : index
    %11 = vector.load %arg5[%c0_8, %c0_9] : memref<4x128xf32, #tpu.memory_space<vmem>>, vector<4x128xf32>
    %cst = arith.constant 0.000000e+00 : f32
    %12 = vector.broadcast %cst : f32 to vector<4x32x128xf32>
    %13 = arith.select %10, %4, %12 : vector<4x32x128xi1>, vector<4x32x128xf32>
    %cst_10 = arith.constant dense<0.000000e+00> : vector<4x128xf32>
    %14 = vector.multi_reduction <add>, %13, %cst_10 [1] : vector<4x32x128xf32> to vector<4x128xf32>
    %15 = arith.addf %11, %14 : vector<4x128xf32>
    %c0_11 = arith.constant 0 : index
    %c0_12 = arith.constant 0 : index
    %16 = vector.load %arg5[%c0_11, %c0_12] : memref<4x128xf32, #tpu.memory_space<vmem>>, vector<4x128xf32>
    tpu.vector_store %arg5[%c0_11, %c0_12], %15 {strides = array<i32>} : memref<4x128xf32, #tpu.memory_space<vmem>>, vector<4x128xf32>,
    %c0_13 = arith.constant 0 : index
    %c0_14 = arith.constant 0 : index
    %17 = vector.load %arg6[%c0_13, %c0_14] : memref<4x128xf32, #tpu.memory_space<vmem>>, vector<4x128xf32>
    %18 = arith.mulf %4, %4 : vector<4x32x128xf32>
    %cst_15 = arith.constant 1.000000e+00 : f32
    %cst_16 = arith.constant 0.000000e+00 : f32
    %19 = vector.broadcast %cst_15 : f32 to vector<4x32x128xf32>
    %20 = vector.broadcast %cst_16 : f32 to vector<4x32x128xf32>
    %21 = arith.select %10, %19, %20 : vector<4x32x128xi1>, vector<4x32x128xf32>
    %22 = arith.addf %18, %21 : vector<4x32x128xf32>
    %cst_17 = arith.constant dense<0.000000e+00> : vector<4x128xf32>
    %23 = vector.multi_reduction <add>, %22, %cst_17 [1] : vector<4x32x128xf32> to vector<4x128xf32>
    %24 = arith.addf %17, %23 : vector<4x128xf32>
    %c0_18 = arith.constant 0 : index
    %c0_19 = arith.constant 0 : index
    %25 = vector.load %arg6[%c0_18, %c0_19] : memref<4x128xf32, #tpu.memory_space<vmem>>, vector<4x128xf32>
    tpu.vector_store %arg6[%c0_18, %c0_19], %24 {strides = array<i32>} : memref<4x128xf32, #tpu.memory_space<vmem>>, vector<4x128xf32>,
    %c0_i32_20 = arith.constant 0 : i32
    %26 = arith.cmpi eq, %arg1, %c0_i32_20 : i32
    %27 = arith.extui %26 : i1 to i32
    %c0_i32_21 = arith.constant 0 : i32
    %28 = arith.cmpi ne, %27, %c0_i32_21 : i32
    scf.if %28 {
      %c0_22 = arith.constant 0 : index
      %c0_23 = arith.constant 0 : index
      %29 = vector.load %arg5[%c0_22, %c0_23] : memref<4x128xf32, #tpu.memory_space<vmem>>, vector<4x128xf32>
      %cst_24 = arith.constant dense<0.000000e+00> : vector<4xf32>
      %30 = vector.multi_reduction <add>, %29, %cst_24 [1] : vector<4x128xf32> to vector<4xf32>
      %c0_25 = arith.constant 0 : index
      %c0_26 = arith.constant 0 : index
      %31 = vector.load %arg6[%c0_25, %c0_26] : memref<4x128xf32, #tpu.memory_space<vmem>>, vector<4x128xf32>
      %cst_27 = arith.constant dense<0.000000e+00> : vector<4xf32>
      %32 = vector.multi_reduction <add>, %31, %cst_27 [1] : vector<4x128xf32> to vector<4xf32>
      %cst_28 = arith.constant 2.000000e+00 : f32
      %33 = vector.broadcast %cst_28 : f32 to vector<4xf32>
      %34 = arith.mulf %33, %30 : vector<4xf32>
      %cst_29 = arith.constant 1.000000e-10 : f32
      %35 = vector.broadcast %cst_29 : f32 to vector<4xf32>
      %36 = arith.addf %32, %35 : vector<4xf32>
      %37 = arith.divf %34, %36 : vector<4xf32>
      %38 = vector.shape_cast %37 : vector<4xf32> to vector<1x4xf32>
      %c0_30 = arith.constant 0 : index
      %c0_31 = arith.constant 0 : index
      %c0_32 = arith.constant 0 : index
      %39 = vector.load %arg4[%c0_30, %c0_31, %c0_32] : memref<1x1x4xf32, #tpu.memory_space<vmem>>, vector<1x1x4xf32>
      %40 = vector.shape_cast %39 : vector<1x1x4xf32> to vector<1x4xf32>
      %41 = vector.shape_cast %38 : vector<1x4xf32> to vector<1x1x4xf32>
      tpu.vector_store %arg4[%c0_30, %c0_31, %c0_32], %41 {strides = array<i32>} : memref<1x1x4xf32, #tpu.memory_space<vmem>>, vector<1x1x4xf32>,
    } else {
    }
    return
  }
  func.func @transform_0(%arg0: i32, %arg1: i32) -> (i32, i32, i32, i32) {
    %c0_i32 = arith.constant 0 : i32
    %c0_i32_0 = arith.constant 0 : i32
    %c0_i32_1 = arith.constant 0 : i32
    return %arg0, %c0_i32, %arg1, %c0_i32_0 : i32, i32, i32, i32
  }
  func.func @transform_1(%arg0: i32, %arg1: i32) -> (i32, i32, i32, i32) {
    %c0_i32 = arith.constant 0 : i32
    %c0_i32_0 = arith.constant 0 : i32
    %c0_i32_1 = arith.constant 0 : i32
    return %arg0, %c0_i32, %arg1, %c0_i32_0 : i32, i32, i32, i32
  }
  func.func @transform_2(%arg0: i32, %arg1: i32) -> (i32, i32, i32) {
    %c0_i32 = arith.constant 0 : i32
    %c0_i32_0 = arith.constant 0 : i32
    %c0_i32_1 = arith.constant 0 : i32
    return %arg0, %c0_i32, %c0_i32_0 : i32, i32, i32
  }
}

</mosaic_0001>

<llo_original>
// kernel: tpu_custom_call.1
$region0: #{tpu_custom_call.1}
  #allocation0 [shape = 'u32[]', space=smem, size = 0x4, offset = 0x4, fixed_abs, tag = 'smem constant byte address 0x4 - core index']
  #allocation1 [shape = 'u32[72,128]{1,0:T(1,128)}', space=vmem, size = 0x9000, scoped, tag = 'internal scratch']
  #allocation2 [shape = 'f32[4,128]{1,0:T(4,128)}', space=vmem, size = 0x800, scoped, tag = 'scratch operand']
  #allocation3 [shape = 'f32[4,128]{1,0:T(4,128)}', space=vmem, size = 0x800, scoped, tag = 'scratch operand']
  %s0 = inlined_call_operand.hbm [shape: f32[2,4,32,128], index: 0, kind: input, shape index: {}]
  %s1 = inlined_call_operand.hbm [shape: s32[2,1,32,128], index: 1, kind: input, shape index: {}]
  %s2 = inlined_call_operand.hbm [shape: f32[2,1,4], index: 2, kind: output, shape index: {}]
  %s3 = sld [smem:[#allocation0]]
  $region57: #{tpu_custom_call.1} parent=0
    _
  %s5 = ssub.s32 1, %s3
  %s6 = scalar_select 0, %s5, %s3
  $region1: #{tpu_custom_call.1} parent=0
    #allocation4 [shape = 'u8[131072]{0}', space=vmem, size = 0x20000, scoped, tag = 'input window, operand 0']
    #allocation5 [shape = 's32[2]{0}', space=sflag, size = 0x8, scoped, tag = 'scoped memory for tpu_custom_call.1']
    #allocation6 [shape = 's32[2]{0}', space=sflag, size = 0x8, scoped, tag = 'scoped memory for tpu_custom_call.1']
    #allocation7 [shape = 'u8[32768]{0}', space=vmem, size = 0x8000, scoped, tag = 'input window, operand 1']
    #allocation8 [shape = 's32[2]{0}', space=sflag, size = 0x8, scoped, tag = 'scoped memory for tpu_custom_call.1']
    #allocation9 [shape = 'u8[1024]{0}', space=vmem, size = 0x400, scoped, tag = 'output window, operand 0']
    %7 = vsyncpa [#allocation5], 0
    %s8 = scalar_lea.sflag [#allocation5], 1
    %9 = vsyncpa %s8, 0
    %10 = vsyncpa [#allocation8], 0
    %s11 = scalar_lea.sflag [#allocation8], 1
    %12 = vsyncpa %s11, 0
    %13 = vsyncpa [#allocation6], 0
    %s14 = scalar_lea.sflag [#allocation6], 1
    %15 = vsyncpa %s14, 0
    loop: start=0, step=1, limit=4
    $region2: #{tpu_custom_call.1} parent=1 // loop_pre_header
      _
    $region3: #{tpu_custom_call.1} parent=1 // loop_header
      %s17 = sphi 0, %s21
      %p18 = scmp.ge.s32.totalorder %s17, 4
      %s24 = sphi 0, %s36
      %s25 = sphi 0, %s32
      %s26 = sphi 0, %s24
      %s27 = sphi 0, %s25
      %s28 = sphi 0, %s26
      %s29 = sphi 0, %s27
      %s41 = sphi 0, %s43
      %s44 = sphi 0, %s41
      %s45 = sphi 0, %s44
      %s61 = sphi 0, %s45
      %s69 = sphi 0, %s71
      %s72 = sphi 0, %s69
      %s73 = sphi 0, %s72
      %s89 = sphi 0, %s73
      %s95 = sphi 0, %s97
      %s98 = sphi 0, %s95
      %s99 = sphi 0, %s98
      %s115 = sphi 0, %s99
    $region4: #{tpu_custom_call.1} parent=1 // loop_header_branch
      %20 = sbr.rel (%p18) target = $region8
    $region5: #{tpu_custom_call.1} parent=1 // loop_body
      %s22 = ssub.s32 %s17, 1
      %s23 = ssub.s32 %s17, 2
      %s30 = sadd.s32 1, %s25
      %p31 = scmp.ge.s32.totalorder %s30, 1
      %s32 = scalar_select %p31, 0, %s30
      %s33 = sadd.s32 1, %s24
      %s34 = scalar_select %p31, %s33, %s24
      %p35 = scmp.ge.s32.totalorder %s34, 2
      %s36 = scalar_select %p35, 0, %s34
      %s37 = ssub.s32 %s24, %s36
      %s38 = ssub.s32 %s25, %s32
      %s39 = sor.u32 %s37, %s38
      %p40 = scmp.eq.s32.totalorder %s39, 0
      %s42 = sadd.s32 %s41, 1
      %s43 = scalar_select %p40, %s41, %s42
      %p46 = pneg %p40
      %p47 = scmp.eq.s32.totalorder %s17, 1
      %p48 = por %p46, %p47
      %p49 = scmp.ne.s32.totalorder %s41, %s44
      %p50 = scmp.eq.s32.totalorder %s17, 0
      %p51 = por %p49, %p50
      %p52 = scmp.ne.s32.totalorder %s41, %s44
      %p53 = scmp.eq.s32.totalorder %s22, 1
      %p54 = por %p52, %p53
      %p55 = scmp.ne.s32.totalorder %s44, %s45
      %p56 = scmp.eq.s32.totalorder %s22, 0
      %p57 = por %p55, %p56
      %p58 = scmp.ne.s32.totalorder %s44, %s45
      %p59 = scmp.eq.s32.totalorder %s23, 1
      %p60 = por %p58, %p59
      %p62 = scmp.ne.s32.totalorder %s45, %s61
      %p63 = scmp.eq.s32.totalorder %s23, 0
      %p64 = por %p62, %p63
      %s65 = ssub.s32 %s24, %s36
      %s66 = ssub.s32 %s25, %s32
      %s67 = sor.u32 %s65, %s66
      %p68 = scmp.eq.s32.totalorder %s67, 0
      %s70 = sadd.s32 %s69, 1
      %s71 = scalar_select %p68, %s69, %s70
      %p74 = pneg %p68
      %p75 = scmp.eq.s32.totalorder %s17, 1
      %p76 = por %p74, %p75
      %p77 = scmp.ne.s32.totalorder %s69, %s72
      %p78 = scmp.eq.s32.totalorder %s17, 0
      %p79 = por %p77, %p78
      %p80 = scmp.ne.s32.totalorder %s69, %s72
      %p81 = scmp.eq.s32.totalorder %s22, 1
      %p82 = por %p80, %p81
      %p83 = scmp.ne.s32.totalorder %s72, %s73
      %p84 = scmp.eq.s32.totalorder %s22, 0
      %p85 = por %p83, %p84
      %p86 = scmp.ne.s32.totalorder %s72, %s73
      %p87 = scmp.eq.s32.totalorder %s23, 1
      %p88 = por %p86, %p87
      %p90 = scmp.ne.s32.totalorder %s73, %s89
      %p91 = scmp.eq.s32.totalorder %s23, 0
      %p92 = por %p90, %p91
      %s93 = ssub.s32 %s24, %s36
      %p94 = scmp.eq.s32.totalorder %s93, 0
      %s96 = sadd.s32 %s95, 1
      %s97 = scalar_select %p94, %s95, %s96
      %p100 = pneg %p94
      %p101 = scmp.eq.s32.totalorder %s17, 1
      %p102 = por %p100, %p101
      %p103 = scmp.ne.s32.totalorder %s95, %s98
      %p104 = scmp.eq.s32.totalorder %s17, 0
      %p105 = por %p103, %p104
      %p106 = scmp.ne.s32.totalorder %s95, %s98
      %p107 = scmp.eq.s32.totalorder %s22, 1
      %p108 = por %p106, %p107
      %p109 = scmp.ne.s32.totalorder %s98, %s99
      %p110 = scmp.eq.s32.totalorder %s22, 0
      %p111 = por %p109, %p110
      %p112 = scmp.ne.s32.totalorder %s98, %s99
      %p113 = scmp.eq.s32.totalorder %s23, 1
      %p114 = por %p112, %p113
      %p116 = scmp.ne.s32.totalorder %s99, %s115
      %p117 = scmp.eq.s32.totalorder %s23, 0
      %p118 = por %p116, %p117
      %p119 = scmp.le.s32.totalorder 1, %s17
      %p120 = scmp.lt.s32.totalorder %s17, 3
      %p121 = pnand %p119, %p120
      %p122 = pneg %p121
      // Predicated region
      $region9: #{tpu_custom_call.1} parent=5 // pred_check
        _
      $region10: #{tpu_custom_call.1} parent=5 // pred_check_branch
        %124 = sbr.rel (%p121) target = $region12
      $region11: #{tpu_custom_call.1} parent=5 // pred_region
        %s125 = ssub.s32 %s17, 1
      $region12: #{tpu_custom_call.1} parent=5 // pred_fallthru
        _
      %p126 = scmp.lt.s32.totalorder %s17, 2
      // Predicated region
      $region13: #{tpu_custom_call.1} parent=5 // pred_check
        %p127 = pneg %p126
      $region14: #{tpu_custom_call.1} parent=5 // pred_check_branch
        %129 = sbr.rel (%p127) target = $region16
      $region15: #{tpu_custom_call.1} parent=5 // pred_region
        // Predicated region
        $region17: #{tpu_custom_call.1} parent=15 // pred_check
          %p130 = pneg %p51
        $region18: #{tpu_custom_call.1} parent=15 // pred_check_branch
          %132 = sbr.rel (%p130) target = $region20
        $region19: #{tpu_custom_call.1} parent=15 // pred_region
          %s133 = sand.u32 %s41, 1
          %s134 = scalar_lea.sflag [#allocation5], %s133
          %s135 = sand.u32 %s41, 1
          %s136 = smul.addr %s135, 128
          %s137 = scalar_lea.vmem [#allocation4], %s136
          %s138 = smul.u32 4, %s25
          %140 = vsyncadd %s134, 0
          %s141 = smul.addr %s24, 16
          %s142 = sadd.s32 %s138, %s141
          %s143 = smul.addr %s142, 8
          %s144 = scalar_lea.hbm %s0, %s143
          %s145 = sshll.u32 %s144, 4
          %s146 = int_to_ptr.hbm [resolvable:$true] %s145
          %s147 = sshll.u32 %s137, 4
          %s148 = int_to_ptr.vmem [resolvable:$true] %s147
          %153 = dma.hbm_to_vmem [thread:$0]  %s146, 2048, %s148, %s134, 128, 128, 8
        $region20: #{tpu_custom_call.1} parent=15 // pred_fallthru
          _
        // Predicated region
        $region21: #{tpu_custom_call.1} parent=15 // pred_check
          %p154 = pneg %p79
        $region22: #{tpu_custom_call.1} parent=15 // pred_check_branch
          %156 = sbr.rel (%p154) target = $region24
        $region23: #{tpu_custom_call.1} parent=15 // pred_region
          %s157 = sand.u32 %s69, 1
          %s158 = scalar_lea.sflag [#allocation8], %s157
          %s159 = sand.u32 %s69, 1
          %s160 = smul.addr %s159, 32
          %s161 = scalar_lea.vmem [#allocation7], %s160
          %s162 = smul.u32 4, %s25
          %164 = vsyncadd %s158, 0
          %s165 = smul.addr %s24, 4
          %s166 = sadd.s32 %s162, %s165
          %s167 = smul.addr %s166, 8
          %s168 = scalar_lea.hbm %s1, %s167
          %s169 = sshll.u32 %s168, 4
          %s170 = int_to_ptr.hbm [resolvable:$true] %s169
          %s171 = sshll.u32 %s161, 4
          %s172 = int_to_ptr.vmem [resolvable:$true] %s171
          %177 = dma.hbm_to_vmem [thread:$0]  %s170, 512, %s172, %s158, 128, 128, 8
        $region24: #{tpu_custom_call.1} parent=15 // pred_fallthru
          _
      $region16: #{tpu_custom_call.1} parent=5 // pred_fallthru
        _
      %p178 = scmp.le.s32.totalorder 1, %s17
      %p179 = scmp.lt.s32.totalorder %s17, 3
      %p180 = pnand %p178, %p179
      %p181 = pneg %p180
      // Predicated region
      $region25: #{tpu_custom_call.1} parent=5 // pred_check
        _
      $region26: #{tpu_custom_call.1} parent=5 // pred_check_branch
        %183 = sbr.rel (%p180) target = $region28
      $region27: #{tpu_custom_call.1} parent=5 // pred_region
        %s184 = ssub.s32 %s17, 1
        %s185 = sand.u32 %s44, 1
        %s186 = scalar_lea.sflag [#allocation5], %s185
        %s187 = sand.u32 %s44, 1
        %s188 = smul.addr %s187, 128
        %s189 = scalar_lea.vmem [#allocation4], %s188
        // Predicated region
        $region29: #{tpu_custom_call.1} parent=27 // pred_check
          %p190 = pneg %p57
        $region30: #{tpu_custom_call.1} parent=27 // pred_check_branch
          %192 = sbr.rel (%p190) target = $region32
        $region31: #{tpu_custom_call.1} parent=27 // pred_region
          %194 = dma.done %s186, 2048
        $region32: #{tpu_custom_call.1} parent=27 // pred_fallthru
          _
        %s195 = sand.u32 %s72, 1
        %s196 = scalar_lea.sflag [#allocation8], %s195
        %s197 = sand.u32 %s72, 1
        %s198 = smul.addr %s197, 32
        %s199 = scalar_lea.vmem [#allocation7], %s198
        // Predicated region
        $region33: #{tpu_custom_call.1} parent=27 // pred_check
          %p200 = pneg %p85
        $region34: #{tpu_custom_call.1} parent=27 // pred_check_branch
          %202 = sbr.rel (%p200) target = $region36
        $region35: #{tpu_custom_call.1} parent=27 // pred_region
          %204 = dma.done %s196, 512
        $region36: #{tpu_custom_call.1} parent=27 // pred_fallthru
          _
        %s205 = sand.u32 %s44, 1
        %s206 = scalar_lea.sflag [#allocation5], %s205
        %s207 = sand.u32 %s44, 1
        %s208 = smul.addr %s207, 128
        %s209 = scalar_lea.vmem [#allocation4], %s208
        %p210 = pneg %p57
        %p211 = pneg %p54
        %s212 = sand.u32 %s72, 1
        %s213 = scalar_lea.sflag [#allocation8], %s212
        %s214 = sand.u32 %s72, 1
        %s215 = smul.addr %s214, 32
        %s216 = scalar_lea.vmem [#allocation7], %s215
        %p217 = pneg %p85
        %p218 = pneg %p82
        %p219 = pneg %p111
        %p220 = pneg %p108
        %s221 = sand.u32 %s98, 1
        %s222 = scalar_lea.sflag [#allocation6], %s221
        %s223 = sand.u32 %s98, 1
        %s224 = scalar_lea.vmem [#allocation9], %s223
        %s225 = smul.u32 4, %s27
        %s226 = smul.u32 4, %s27
        %p227 = scmp.eq.s32.totalorder %s27, 0
        // Predicated region
        $region37: #{tpu_custom_call.1} parent=27 // pred_check
          %p228 = pneg %p227
        $region38: #{tpu_custom_call.1} parent=27 // pred_check_branch
          %230 = sbr.rel (%p228) target = $region40
        $region39: #{tpu_custom_call.1} parent=27 // pred_region
          %231 = vst [vmem:[#allocation2] sm:$0xf] 0.0
          %232 = vst [vmem:[#allocation3] sm:$0xf] 0.0
        $region40: #{tpu_custom_call.1} parent=27 // pred_fallthru
          _
        %v233 = vld [vmem:[%s189] sm:$0xff]
        %v234 = vld [vmem:[%s189 + $0x8] sm:$0xff]
        %v235 = vld [vmem:[%s189 + $0x10] sm:$0xff]
        %v236 = vld [vmem:[%s189 + $0x18] sm:$0xff]
        %v237 = vld [vmem:[%s189 + $0x20] sm:$0xff]
        %v238 = vld [vmem:[%s189 + $0x28] sm:$0xff]
        %v239 = vld [vmem:[%s189 + $0x30] sm:$0xff]
        %v240 = vld [vmem:[%s189 + $0x38] sm:$0xff]
        %v241 = vld [vmem:[%s189 + $0x40] sm:$0xff]
        %v242 = vld [vmem:[%s189 + $0x48] sm:$0xff]
        %v243 = vld [vmem:[%s189 + $0x50] sm:$0xff]
        %v244 = vld [vmem:[%s189 + $0x58] sm:$0xff]
        %v245 = vld [vmem:[%s189 + $0x60] sm:$0xff]
        %v246 = vld [vmem:[%s189 + $0x68] sm:$0xff]
        %v247 = vld [vmem:[%s189 + $0x70] sm:$0xff]
        %v248 = vld [vmem:[%s189 + $0x78] sm:$0xff]
        %v249 = vld [vmem:[%s199] sm:$0xff]
        %v250 = vld [vmem:[%s199 + $0x8] sm:$0xff]
        %v251 = vld [vmem:[%s199 + $0x10] sm:$0xff]
        %v252 = vld [vmem:[%s199 + $0x18] sm:$0xff]
        %vm253 = vcmp.eq.s32.totalorder %v249, 0
        %vm254 = vcmp.eq.s32.totalorder %v250, 0
        %vm255 = vcmp.eq.s32.totalorder %v251, 0
        %vm256 = vcmp.eq.s32.totalorder %v252, 0
        %vm257 = vcmp.eq.s32.totalorder %v249, 1
        %vm258 = vcmp.eq.s32.totalorder %v250, 1
        %vm259 = vcmp.eq.s32.totalorder %v251, 1
        %vm260 = vcmp.eq.s32.totalorder %v252, 1
        %vm261 = vcmp.eq.s32.totalorder %v249, 2
        %vm262 = vcmp.eq.s32.totalorder %v250, 2
        %vm263 = vcmp.eq.s32.totalorder %v251, 2
        %vm264 = vcmp.eq.s32.totalorder %v252, 2
        %vm265 = vcmp.eq.s32.totalorder %v249, 3
        %vm266 = vcmp.eq.s32.totalorder %v250, 3
        %vm267 = vcmp.eq.s32.totalorder %v251, 3
        %vm268 = vcmp.eq.s32.totalorder %v252, 3
        %v269 = vld [vmem:[#allocation2] sm:$0xf]
        %v270 = vsel %vm253, %v233, 0.0
        %v271 = vsel %vm254, %v234, 0.0
        %v272 = vsel %vm255, %v235, 0.0
        %v273 = vsel %vm256, %v236, 0.0
        %v274 = vsel %vm257, %v237, 0.0
        %v275 = vsel %vm258, %v238, 0.0
        %v276 = vsel %vm259, %v239, 0.0
        %v277 = vsel %vm260, %v240, 0.0
        %v278 = vsel %vm261, %v241, 0.0
        %v279 = vsel %vm262, %v242, 0.0
        %v280 = vsel %vm263, %v243, 0.0
        %v281 = vsel %vm264, %v244, 0.0
        %v282 = vsel %vm265, %v245, 0.0
        %v283 = vsel %vm266, %v246, 0.0
        %v284 = vsel %vm267, %v247, 0.0
        %v285 = vsel %vm268, %v248, 0.0
        %v286 = vadd.f32 %v270, %v271
        %v287 = vadd.f32 %v286, %v272
        %v288 = vadd.f32 %v287, %v273
        %v289 = vrot.slane %v288, 4
        %v290 = vadd.f32 %v288, %v289
        %v291 = vrot.slane %v290, 2
        %v292 = vadd.f32 %v290, %v291
        %v293 = vrot.slane %v292, 1
        %v294 = vadd.f32 %v292, %v293
        %v295 = vadd.f32 %v274, %v275
        %v296 = vadd.f32 %v295, %v276
        %v297 = vadd.f32 %v296, %v277
        %v298 = vrot.slane %v297, 4
        %v299 = vadd.f32 %v297, %v298
        %v300 = vrot.slane %v299, 2
        %v301 = vadd.f32 %v299, %v300
        %v302 = vrot.slane %v301, 1
        %v303 = vadd.f32 %v301, %v302
        %v304 = vadd.f32 %v278, %v279
        %v305 = vadd.f32 %v304, %v280
        %v306 = vadd.f32 %v305, %v281
        %v307 = vrot.slane %v306, 4
        %v308 = vadd.f32 %v306, %v307
        %v309 = vrot.slane %v308, 2
        %v310 = vadd.f32 %v308, %v309
        %v311 = vrot.slane %v310, 1
        %v312 = vadd.f32 %v310, %v311
        %v313 = vadd.f32 %v282, %v283
        %v314 = vadd.f32 %v313, %v284
        %v315 = vadd.f32 %v314, %v285
        %v316 = vrot.slane %v315, 4
        %v317 = vadd.f32 %v315, %v316
        %v318 = vrot.slane %v317, 2
        %v319 = vadd.f32 %v317, %v318
        %v320 = vrot.slane %v319, 1
        %v321 = vadd.f32 %v319, %v320
        %vm326 = vcmask 1041409
        %v327 = vsel %vm326, %v303, %v294
        %vm328 = vcmask 1042434
        %v329 = vsel %vm328, %v312, %v327
        %vm330 = vcmask 1043459
        %v331 = vsel %vm330, %v321, %v329
        %v333 = vadd.f32 %v269, %v331
        %334 = vst [vmem:[#allocation2] sm:$0xf] %v333
        %v335 = vld [vmem:[#allocation3] sm:$0xf]
        %v336 = vmul.f32 %v233, %v233
        %v337 = vmul.f32 %v234, %v234
        %v338 = vmul.f32 %v235, %v235
        %v339 = vmul.f32 %v236, %v236
        %v340 = vmul.f32 %v237, %v237
        %v341 = vmul.f32 %v238, %v238
        %v342 = vmul.f32 %v239, %v239
        %v343 = vmul.f32 %v240, %v240
        %v344 = vmul.f32 %v241, %v241
        %v345 = vmul.f32 %v242, %v242
        %v346 = vmul.f32 %v243, %v243
        %v347 = vmul.f32 %v244, %v244
        %v348 = vmul.f32 %v245, %v245
        %v349 = vmul.f32 %v246, %v246
        %v350 = vmul.f32 %v247, %v247
        %v351 = vmul.f32 %v248, %v248
        %v352 = vsel %vm253, 1.0, 0.0
        %v353 = vsel %vm254, 1.0, 0.0
        %v354 = vsel %vm255, 1.0, 0.0
        %v355 = vsel %vm256, 1.0, 0.0
        %v356 = vsel %vm257, 1.0, 0.0
        %v357 = vsel %vm258, 1.0, 0.0
        %v358 = vsel %vm259, 1.0, 0.0
        %v359 = vsel %vm260, 1.0, 0.0
        %v360 = vsel %vm261, 1.0, 0.0
        %v361 = vsel %vm262, 1.0, 0.0
        %v362 = vsel %vm263, 1.0, 0.0
        %v363 = vsel %vm264, 1.0, 0.0
        %v364 = vsel %vm265, 1.0, 0.0
        %v365 = vsel %vm266, 1.0, 0.0
        %v366 = vsel %vm267, 1.0, 0.0
        %v367 = vsel %vm268, 1.0, 0.0
        %v368 = vadd.f32 %v336, %v352
        %v369 = vadd.f32 %v337, %v353
        %v370 = vadd.f32 %v338, %v354
        %v371 = vadd.f32 %v339, %v355
        %v372 = vadd.f32 %v340, %v356
        %v373 = vadd.f32 %v341, %v357
        %v374 = vadd.f32 %v342, %v358
        %v375 = vadd.f32 %v343, %v359
        %v376 = vadd.f32 %v344, %v360
        %v377 = vadd.f32 %v345, %v361
        %v378 = vadd.f32 %v346, %v362
        %v379 = vadd.f32 %v347, %v363
        %v380 = vadd.f32 %v348, %v364
        %v381 = vadd.f32 %v349, %v365
        %v382 = vadd.f32 %v350, %v366
        %v383 = vadd.f32 %v351, %v367
        %v384 = vadd.f32 %v368, %v369
        %v385 = vadd.f32 %v384, %v370
        %v386 = vadd.f32 %v385, %v371
        %v387 = vrot.slane %v386, 4
        %v388 = vadd.f32 %v386, %v387
        %v389 = vrot.slane %v388, 2
        %v390 = vadd.f32 %v388, %v389
        %v391 = vrot.slane %v390, 1
        %v392 = vadd.f32 %v390, %v391
        %v393 = vadd.f32 %v372, %v373
        %v394 = vadd.f32 %v393, %v374
        %v395 = vadd.f32 %v394, %v375
        %v396 = vrot.slane %v395, 4
        %v397 = vadd.f32 %v395, %v396
        %v398 = vrot.slane %v397, 2
        %v399 = vadd.f32 %v397, %v398
        %v400 = vrot.slane %v399, 1
        %v401 = vadd.f32 %v399, %v400
        %v402 = vadd.f32 %v376, %v377
        %v403 = vadd.f32 %v402, %v378
        %v404 = vadd.f32 %v403, %v379
        %v405 = vrot.slane %v404, 4
        %v406 = vadd.f32 %v404, %v405
        %v407 = vrot.slane %v406, 2
        %v408 = vadd.f32 %v406, %v407
        %v409 = vrot.slane %v408, 1
        %v410 = vadd.f32 %v408, %v409
        %v411 = vadd.f32 %v380, %v381
        %v412 = vadd.f32 %v411, %v382
        %v413 = vadd.f32 %v412, %v383
        %v414 = vrot.slane %v413, 4
        %v415 = vadd.f32 %v413, %v414
        %v416 = vrot.slane %v415, 2
        %v417 = vadd.f32 %v415, %v416
        %v418 = vrot.slane %v417, 1
        %v419 = vadd.f32 %v417, %v418
        %v424 = vsel %vm326, %v401, %v392
        %v425 = vsel %vm328, %v410, %v424
        %v426 = vsel %vm330, %v419, %v425
        %v428 = vadd.f32 %v335, %v426
        %429 = vst [vmem:[#allocation3] sm:$0xf] %v428
        // Predicated region
        $region41: #{tpu_custom_call.1} parent=27 // pred_check
          %p430 = pneg %p227
        $region42: #{tpu_custom_call.1} parent=27 // pred_check_branch
          %432 = sbr.rel (%p430) target = $region44
        $region43: #{tpu_custom_call.1} parent=27 // pred_region
          %v433 = vld [vmem:[#allocation2] sm:$0xf]
          %vm434 = vcmask 1043456
          %v435 = vsel %vm434, %v433, 0.0
          %436 = vadd.xlane.f32.xlu0 %v435
          %v437 = vpop.xlane.xlu0 %436
          %v438 = vld [vmem:[#allocation3] sm:$0xf]
          %v439 = vsel %vm434, %v438, 0.0
          %440 = vadd.xlane.f32.xlu0 %v439
          %v441 = vpop.xlane.xlu0 %440
          %v442 = vmul.f32 %v437, 2.0
          %v443 = vadd.f32 %v441, 1e-10
          %v444 = vrcp.pop %v443
          %v445 = vmul.f32 %v443, %v444
          %v446 = vsub.f32 1.0, %v445
          %v447 = vmul.f32 %v444, %v446
          %v448 = vadd.f32 %v444, %v447
          %vm449 = vweird.f32 %v443
          %vm450 = vweird.f32 %v444
          %vm451 = vmor %vm449, %vm450
          %v452 = vsel %vm451, %v444, %v448
          %v453 = vand.u32 2147483647, %v443
          %vm454 = vcmp.eq.f32.partialorder %v453, 8.507059e+37
          %v455 = vand.u32 %v443, 2147483648
          %v456 = vor.u32 1.1754944e-38, %v455
          %v457 = vsel %vm454, %v456, %v452
          %v458 = vmul.f32 %v442, %v457
          %v460 = vlaneseq
          %v461 = vand.u32 %v460, 127
          %v462 = vperm.slane %v458, %v461
          %vm464 = vcmask 24576
          %465 = vst.msk [vmem:[%s224] sm:$0x1] %vm464, %v462
        $region44: #{tpu_custom_call.1} parent=27 // pred_fallthru
          _
        %s466 = sand.u32 %s98, 1
        %s467 = scalar_lea.sflag [#allocation6], %s466
        %s468 = sand.u32 %s98, 1
        %s469 = scalar_lea.vmem [#allocation9], %s468
        // Predicated region
        $region45: #{tpu_custom_call.1} parent=27 // pred_check
          %p470 = pneg %p108
        $region46: #{tpu_custom_call.1} parent=27 // pred_check_branch
          %472 = sbr.rel (%p470) target = $region48
        $region47: #{tpu_custom_call.1} parent=27 // pred_region
          %474 = vsyncadd %s467, 0
          %s475 = scalar_lea.hbm %s2, %s26
          %s477 = sshll.u32 %s469, 4
          %s478 = int_to_ptr.vmem [resolvable:$true] %s477
          %s479 = sshll.u32 %s475, 4
          %s480 = int_to_ptr.hbm [resolvable:$true] %s479
          %482 = dma.vmem_to_hbm [thread:$0]  %s478, 16, %s480, %s467
        $region48: #{tpu_custom_call.1} parent=27 // pred_fallthru
          _
      $region28: #{tpu_custom_call.1} parent=5 // pred_fallthru
        _
      %p483 = scmp.le.s32.totalorder 2, %s17
      // Predicated region
      $region49: #{tpu_custom_call.1} parent=5 // pred_check
        %p484 = pneg %p483
      $region50: #{tpu_custom_call.1} parent=5 // pred_check_branch
        %486 = sbr.rel (%p484) target = $region52
      $region51: #{tpu_custom_call.1} parent=5 // pred_region
        %s487 = ssub.s32 %s17, 2
        // Predicated region
        $region53: #{tpu_custom_call.1} parent=51 // pred_check
          %p488 = pneg %p114
        $region54: #{tpu_custom_call.1} parent=51 // pred_check_branch
          %490 = sbr.rel (%p488) target = $region56
        $region55: #{tpu_custom_call.1} parent=51 // pred_region
          %s491 = sand.u32 %s99, 1
          %s492 = scalar_lea.sflag [#allocation6], %s491
          %s493 = sand.u32 %s99, 1
          %s494 = scalar_lea.vmem [#allocation9], %s493
          %496 = dma.done %s492, 16
        $region56: #{tpu_custom_call.1} parent=51 // pred_fallthru
          _
      $region52: #{tpu_custom_call.1} parent=5 // pred_fallthru
        _
    $region6: #{tpu_custom_call.1} parent=1 // loop_footer
      %s21 = sadd.s32 1, %s17
    $region7: #{tpu_custom_call.1} parent=1 // loop_footer_branch
      %16 = sbr.rel target = $region3
    $region8: #{tpu_custom_call.1} parent=1 // loop_exit
      _
    %497 = vsyncpa [#allocation5], 1
    %s498 = scalar_lea.sflag [#allocation5], 1
    %499 = vsyncpa %s498, 1
    %500 = vsyncpa [#allocation8], 1
    %s501 = scalar_lea.sflag [#allocation8], 1
    %502 = vsyncpa %s501, 1
    %503 = vsyncpa [#allocation6], 1
    %s504 = scalar_lea.sflag [#allocation6], 1
    %505 = vsyncpa %s504, 1

</llo_original>
